<compile_context>
chip_gen: v6e
topology: v6e:2x2x1
jax: 0.10.0
libtpu: 0.0.40
codegen_flags: <defaults>
</compile_context>

<pallas_src>
import jax
import jax.numpy as jnp
from jax.experimental import pallas as pl
from jax.experimental.pallas import tpu as pltpu

_BN_EPS = 1e-5


def _conv1x1(w_ref, x2d):
    """1x1 Conv1d on one batch item: (H, C_in) x (C_in, TL) -> (H, TL) in f32.

    For tiny C_in the MXU would be almost all padding + operand relayout, so lower to
    VPU multiply-accumulates; otherwise use the MXU with f32 accumulation.
    """
    _, c_in = w_ref.shape
    if c_in <= 8:
        w = w_ref[...].astype(jnp.float32)                 # (H, C_in)
        xf = x2d.astype(jnp.float32)                       # (C_in, TL)
        acc = w[:, 0][:, None] * xf[0][None, :]            # (H, TL)
        for c in range(1, c_in):
            acc = acc + w[:, c][:, None] * xf[c][None, :]
        return acc
    return jnp.dot(w_ref[...], x2d, preferred_element_type=jnp.float32)


def _stats_kernel(x_ref, w1_ref, sum_ref, sumsq_ref):
    """Pass 1: per-chunk partial BN statistics of h = W1 @ x.

    x_ref:     (NB, C_in, TL)  one (batch-block, length-tile) of x, lane dim = L
    w1_ref:    (H, C_in)       conv1 weight (PyTorch (out, in) layout, k=1 squeezed)
    sum_ref:   (1, H, 1) f32   partial sum of h over this chunk
    sumsq_ref: (1, H, 1) f32   partial sum of h^2 over this chunk
    """
    nb = x_ref.shape[0]
    h_dim = w1_ref.shape[0]
    s = jnp.zeros((h_dim, 1), jnp.float32)
    ss = jnp.zeros((h_dim, 1), jnp.float32)
    for b in range(nb):                                    # nb is small & static (unrolled)
        h = _conv1x1(w1_ref, x_ref[b])                     # (H, TL) f32
        s = s + jnp.sum(h, axis=1, keepdims=True)
        ss = ss + jnp.sum(h * h, axis=1, keepdims=True)
    sum_ref[0] = s
    sumsq_ref[0] = ss


def _apply_kernel(x_ref, w1_ref, w2_ref, scale_ref, shift_ref, o_ref):
    """Pass 2: h = W1 @ x ; h = h*scale + shift ; ReLU ; out = W2 @ h.

    x_ref: (NB, C_in, TL); w1_ref: (H, C_in); w2_ref: (C_out, H)
    scale_ref / shift_ref: (H, 1) f32 folded BatchNorm parameters
    o_ref: (NB, C_out, TL)
    """
    nb = x_ref.shape[0]
    w2 = w2_ref[...]
    scale = scale_ref[...]
    shift = shift_ref[...]
    for b in range(nb):
        h = _conv1x1(w1_ref, x_ref[b])                     # (H, TL) f32
        h = jnp.maximum(h * scale + shift, 0.0)            # folded BN (one FMA) + ReLU
        out = jnp.dot(w2, h.astype(w2.dtype), preferred_element_type=jnp.float32)
        o_ref[b] = out.astype(o_ref.dtype)


def mlp1d_forward(x_ncl, w1, gamma, beta, w2, *,
                  max_tl=4096,
                  max_nb=32,
                  block_budget_bytes=16 * 1024 * 1024,
                  vmem_limit_bytes=48 * 1024 * 1024):
    """MLP1D forward on PyTorch NCL layout (no wrapper transposes).

    x_ncl: (N, C_in, L); w1: (H, C_in); gamma/beta: (H,); w2: (C_out, H)
    returns (N, C_out, L)
    """
    N, C_in, L = x_ncl.shape
    H = w1.shape[0]
    C_out = w2.shape[0]
    itemsize = x_ncl.dtype.itemsize

    # ---- Length tiling: lane-dense tiles (multiple of 128) up to max_tl; no full-L fallback.
    if L <= max_tl:
        tl, n_lt = L, 1
    else:
        n_lt = int(pl.cdiv(L, max_tl))
        tl = int(pl.cdiv(int(pl.cdiv(L, n_lt)), 128)) * 128
    L_pad = n_lt * tl

    # ---- Batch blocking: amortize per-step overhead, sized against a VMEM budget.
    per_n_bytes = 2 * (C_in + C_out) * tl * itemsize       # double-buffered x + out blocks / item
    temp_bytes = 2 * (H + C_out) * tl * 4                   # in-kernel f32 temporaries per step
    avail = max(block_budget_bytes - temp_bytes, per_n_bytes)
    nb = int(max(1, min(N, max_nb, avail // per_n_bytes)))
    for cand in range(nb, max(1, nb // 2) - 1, -1):         # prefer a divisor of N (no batch pad)
        if N % cand == 0:
            nb = cand
            break
    n_bt = int(pl.cdiv(N, nb))
    N_pad = n_bt * nb

    # ---- Pad (exact for BN stats: zero inputs contribute zero sums; divide by true N*L).
    if (N_pad, L_pad) != (N, L):
        x_p = jnp.pad(x_ncl, ((0, N_pad - N), (0, 0), (0, L_pad - L)))
    else:
        x_p = x_ncl

    grid = (n_bt, n_lt)
    x_spec = pl.BlockSpec((nb, C_in, tl), lambda n, l: (n, 0, l))
    w1_spec = pl.BlockSpec((H, C_in), lambda n, l: (0, 0))

    # ---- Pass 1: per-chunk partial sums / sums-of-squares (fully parallel grid). ----
    n_chunks = n_bt * n_lt
    part_spec = pl.BlockSpec((1, H, 1), lambda n, l, _g=n_lt: (n * _g + l, 0, 0))
    psum, psumsq = pl.pallas_call(
        _stats_kernel,
        out_shape=(jax.ShapeDtypeStruct((n_chunks, H, 1), jnp.float32),
                   jax.ShapeDtypeStruct((n_chunks, H, 1), jnp.float32)),
        grid=grid,
        in_specs=[x_spec, w1_spec],
        out_specs=(part_spec, part_spec),
        compiler_params=pltpu.CompilerParams(
            dimension_semantics=("parallel", "parallel"),
            vmem_limit_bytes=vmem_limit_bytes),
    )(x_p, w1)

    # ---- Tiny final reduce + BatchNorm fold in plain JAX. ----
    m_total = float(N * L)                                   # true element count (padding excluded)
    sums = jnp.sum(psum, axis=0)[:, 0]                       # (H,)
    sumsqs = jnp.sum(psumsq, axis=0)[:, 0]                    # (H,)
    mean = sums / m_total
    var = jnp.maximum(sumsqs / m_total - mean * mean, 0.0)   # biased batch variance
    scale = gamma.astype(jnp.float32) * jax.lax.rsqrt(var + _BN_EPS)
    shift = beta.astype(jnp.float32) - mean * scale
    scale2d = scale.reshape(H, 1)
    shift2d = shift.reshape(H, 1)

    # ---- Pass 2: normalize + ReLU + second 1x1 conv (fully parallel grid). ----
    out_p = pl.pallas_call(
        _apply_kernel,
        out_shape=jax.ShapeDtypeStruct((N_pad, C_out, L_pad), x_ncl.dtype),
        grid=grid,
        in_specs=[
            x_spec,
            w1_spec,
            pl.BlockSpec((C_out, H), lambda n, l: (0, 0)),
            pl.BlockSpec((H, 1), lambda n, l: (0, 0)),
            pl.BlockSpec((H, 1), lambda n, l: (0, 0)),
        ],
        out_specs=pl.BlockSpec((nb, C_out, tl), lambda n, l: (n, 0, l)),
        compiler_params=pltpu.CompilerParams(
            dimension_semantics=("parallel", "parallel"),
            vmem_limit_bytes=vmem_limit_bytes),
    )(x_p, w1, w2, scale2d, shift2d)

    if (N_pad, L_pad) != (N, L):
        out_p = out_p[:N, :, :L]
    return out_p


def _reference_forward(x_ncl, w1, gamma, beta, w2):
    """Pure-JAX reference mirroring PyTorch semantics (training-mode BatchNorm1d)."""
    h = jnp.einsum('hc,ncl->nhl', w1.astype(jnp.float32), x_ncl.astype(jnp.float32))
    mean = jnp.mean(h, axis=(0, 2), keepdims=True)
    var = jnp.mean((h - mean) ** 2, axis=(0, 2), keepdims=True)   # biased
    h = (h - mean) / jnp.sqrt(var + _BN_EPS)
    h = h * gamma[None, :, None] + beta[None, :, None]
    h = jnp.maximum(h, 0.0)
    out = jnp.einsum('oh,nhl->nol', w2.astype(jnp.float32), h)
    return out.astype(x_ncl.dtype)


if __name__ == "__main__":
    # Small shapes consistent with the module: batch=2, in_channels=4, length=16,
    # hid_channels=32, out_channels=16.
    N, C_in, L = 2, 4, 16
    H, C_out = 32, 16

    key = jax.random.PRNGKey(0)
    kx, k1, k2 = jax.random.split(key, 3)

    x = jax.random.normal(kx, (N, C_in, L), dtype=jnp.float32)
    # Conv1d weights in PyTorch (out_ch, in_ch, 1) layout with the kernel dim squeezed.
    w1 = jax.random.normal(k1, (H, C_in), dtype=jnp.float32) * 0.1
    w2 = jax.random.normal(k2, (C_out, H), dtype=jnp.float32) * 0.1
    # BatchNorm1d affine params at PyTorch init: gamma=1, beta=0.
    gamma = jnp.ones((H,), dtype=jnp.float32)
    beta = jnp.zeros((H,), dtype=jnp.float32)

    out = mlp1d_forward(x, w1, gamma, beta, w2)
    out = jax.block_until_ready(out)
    ref = _reference_forward(x, w1, gamma, beta, w2)
    assert out.shape == (N, C_out, L), out.shape
    assert jnp.allclose(out, ref, atol=1e-4, rtol=1e-4), "mismatch vs reference (small)"

    # Second check exercising L tiling + tail padding + multi-batch blocking (kept small).
    N2, L2 = 3, 4100   # L2 > max_tl and not a multiple of 128 -> padded tail, multiple L tiles
    x2 = jax.random.normal(jax.random.PRNGKey(1), (N2, C_in, L2), dtype=jnp.float32)
    out2 = jax.block_until_ready(mlp1d_forward(x2, w1, gamma, beta, w2, max_tl=2048))
    ref2 = _reference_forward(x2, w1, gamma, beta, w2)
    assert out2.shape == (N2, C_out, L2), out2.shape
    assert jnp.allclose(out2, ref2, atol=1e-4, rtol=1e-4), "mismatch vs reference (tiled)"

    print("KERNEL_OK")
</pallas_src>

<mosaic_0001>
module attributes {stable_mosaic.version = 11 : i64} {
  func.func @_stats_kernel(%arg0: i32, %arg1: i32, %arg2: memref<2x4x16xf32, #tpu.memory_space<vmem>>, %arg3: memref<32x4xf32, #tpu.memory_space<vmem>>, %arg4: memref<1x32x1xf32, #tpu.memory_space<vmem>>, %arg5: memref<1x32x1xf32, #tpu.memory_space<vmem>>) attributes {dimension_semantics = [#tpu.dimension_semantics<parallel>, #tpu.dimension_semantics<parallel>], iteration_bounds = array<i64: 1, 1>, scalar_prefetch = 0 : i64, scratch_operands = 0 : i64, tpu.core_type = #tpu.core_type<tc>, window_params = [{transform_indices = @transform_0, window_bounds = array<i64: 2, 4, 16>}, {pipeline_mode = #tpu.pipeline_mode<synchronous>, transform_indices = @transform_1, window_bounds = array<i64: 32, 4>}, {transform_indices = @transform_2, window_bounds = array<i64: 1, 32, 1>}, {transform_indices = @transform_3, window_bounds = array<i64: 1, 32, 1>}]} {
    %cst = arith.constant 0.000000e+00 : f32
    %0 = vector.broadcast %cst : f32 to vector<32x1xf32>
    %cst_0 = arith.constant 0.000000e+00 : f32
    %1 = vector.broadcast %cst_0 : f32 to vector<32x1xf32>
    %c0 = arith.constant 0 : index
    %c0_1 = arith.constant 0 : index
    %c0_2 = arith.constant 0 : index
    %2 = vector.load %arg2[%c0, %c0_1, %c0_2] : memref<2x4x16xf32, #tpu.memory_space<vmem>>, vector<1x4x16xf32>
    %3 = vector.shape_cast %2 : vector<1x4x16xf32> to vector<4x16xf32>
    %c0_3 = arith.constant 0 : index
    %c0_4 = arith.constant 0 : index
    %4 = vector.load %arg3[%c0_3, %c0_4] : memref<32x4xf32, #tpu.memory_space<vmem>>, vector<32x4xf32>
    %5 = vector.extract_strided_slice %4 {offsets = [0, 0], sizes = [32, 1], strides = [1, 1]} : vector<32x4xf32> to vector<32x1xf32>
    %6 = vector.shape_cast %5 : vector<32x1xf32> to vector<32xf32>
    %7 = vector.shape_cast %6 : vector<32xf32> to vector<32x1xf32>
    %8 = vector.extract_strided_slice %3 {offsets = [0, 0], sizes = [1, 16], strides = [1, 1]} : vector<4x16xf32> to vector<1x16xf32>
    %9 = vector.shape_cast %8 : vector<1x16xf32> to vector<16xf32>
    %10 = vector.shape_cast %9 : vector<16xf32> to vector<1x16xf32>
    %11 = vector.broadcast %7 : vector<32x1xf32> to vector<32x16xf32>
    %12 = vector.broadcast %10 : vector<1x16xf32> to vector<32x16xf32>
    %13 = arith.mulf %11, %12 : vector<32x16xf32>
    %14 = vector.extract_strided_slice %4 {offsets = [0, 1], sizes = [32, 1], strides = [1, 1]} : vector<32x4xf32> to vector<32x1xf32>
    %15 = vector.shape_cast %14 : vector<32x1xf32> to vector<32xf32>
    %16 = vector.shape_cast %15 : vector<32xf32> to vector<32x1xf32>
    %17 = vector.extract_strided_slice %3 {offsets = [1, 0], sizes = [1, 16], strides = [1, 1]} : vector<4x16xf32> to vector<1x16xf32>
    %18 = vector.shape_cast %17 : vector<1x16xf32> to vector<16xf32>
    %19 = vector.shape_cast %18 : vector<16xf32> to vector<1x16xf32>
    %20 = vector.broadcast %16 : vector<32x1xf32> to vector<32x16xf32>
    %21 = vector.broadcast %19 : vector<1x16xf32> to vector<32x16xf32>
    %22 = arith.mulf %20, %21 : vector<32x16xf32>
    %23 = arith.addf %13, %22 : vector<32x16xf32>
    %24 = vector.extract_strided_slice %4 {offsets = [0, 2], sizes = [32, 1], strides = [1, 1]} : vector<32x4xf32> to vector<32x1xf32>
    %25 = vector.shape_cast %24 : vector<32x1xf32> to vector<32xf32>
    %26 = vector.shape_cast %25 : vector<32xf32> to vector<32x1xf32>
    %27 = vector.extract_strided_slice %3 {offsets = [2, 0], sizes = [1, 16], strides = [1, 1]} : vector<4x16xf32> to vector<1x16xf32>
    %28 = vector.shape_cast %27 : vector<1x16xf32> to vector<16xf32>
    %29 = vector.shape_cast %28 : vector<16xf32> to vector<1x16xf32>
    %30 = vector.broadcast %26 : vector<32x1xf32> to vector<32x16xf32>
    %31 = vector.broadcast %29 : vector<1x16xf32> to vector<32x16xf32>
    %32 = arith.mulf %30, %31 : vector<32x16xf32>
    %33 = arith.addf %23, %32 : vector<32x16xf32>
    %34 = vector.extract_strided_slice %4 {offsets = [0, 3], sizes = [32, 1], strides = [1, 1]} : vector<32x4xf32> to vector<32x1xf32>
    %35 = vector.shape_cast %34 : vector<32x1xf32> to vector<32xf32>
    %36 = vector.shape_cast %35 : vector<32xf32> to vector<32x1xf32>
    %37 = vector.extract_strided_slice %3 {offsets = [3, 0], sizes = [1, 16], strides = [1, 1]} : vector<4x16xf32> to vector<1x16xf32>
    %38 = vector.shape_cast %37 : vector<1x16xf32> to vector<16xf32>
    %39 = vector.shape_cast %38 : vector<16xf32> to vector<1x16xf32>
    %40 = vector.broadcast %36 : vector<32x1xf32> to vector<32x16xf32>
    %41 = vector.broadcast %39 : vector<1x16xf32> to vector<32x16xf32>
    %42 = arith.mulf %40, %41 : vector<32x16xf32>
    %43 = arith.addf %33, %42 : vector<32x16xf32>
    %cst_5 = arith.constant dense<0.000000e+00> : vector<32xf32>
    %44 = vector.multi_reduction <add>, %43, %cst_5 [1] : vector<32x16xf32> to vector<32xf32>
    %45 = vector.shape_cast %44 : vector<32xf32> to vector<32x1xf32>
    %46 = arith.addf %0, %45 : vector<32x1xf32>
    %47 = arith.mulf %43, %43 : vector<32x16xf32>
    %cst_6 = arith.constant dense<0.000000e+00> : vector<32xf32>
    %48 = vector.multi_reduction <add>, %47, %cst_6 [1] : vector<32x16xf32> to vector<32xf32>
    %49 = vector.shape_cast %48 : vector<32xf32> to vector<32x1xf32>
    %50 = arith.addf %1, %49 : vector<32x1xf32>
    %c1 = arith.constant 1 : index
    %c0_7 = arith.constant 0 : index
    %c0_8 = arith.constant 0 : index
    %51 = vector.load %arg2[%c1, %c0_7, %c0_8] : memref<2x4x16xf32, #tpu.memory_space<vmem>>, vector<1x4x16xf32>
    %52 = vector.shape_cast %51 : vector<1x4x16xf32> to vector<4x16xf32>
    %c0_9 = arith.constant 0 : index
    %c0_10 = arith.constant 0 : index
    %53 = vector.load %arg3[%c0_9, %c0_10] : memref<32x4xf32, #tpu.memory_space<vmem>>, vector<32x4xf32>
    %54 = vector.extract_strided_slice %53 {offsets = [0, 0], sizes = [32, 1], strides = [1, 1]} : vector<32x4xf32> to vector<32x1xf32>
    %55 = vector.shape_cast %54 : vector<32x1xf32> to vector<32xf32>
    %56 = vector.shape_cast %55 : vector<32xf32> to vector<32x1xf32>
    %57 = vector.extract_strided_slice %52 {offsets = [0, 0], sizes = [1, 16], strides = [1, 1]} : vector<4x16xf32> to vector<1x16xf32>
    %58 = vector.shape_cast %57 : vector<1x16xf32> to vector<16xf32>
    %59 = vector.shape_cast %58 : vector<16xf32> to vector<1x16xf32>
    %60 = vector.broadcast %56 : vector<32x1xf32> to vector<32x16xf32>
    %61 = vector.broadcast %59 : vector<1x16xf32> to vector<32x16xf32>
    %62 = arith.mulf %60, %61 : vector<32x16xf32>
    %63 = vector.extract_strided_slice %53 {offsets = [0, 1], sizes = [32, 1], strides = [1, 1]} : vector<32x4xf32> to vector<32x1xf32>
    %64 = vector.shape_cast %63 : vector<32x1xf32> to vector<32xf32>
    %65 = vector.shape_cast %64 : vector<32xf32> to vector<32x1xf32>
    %66 = vector.extract_strided_slice %52 {offsets = [1, 0], sizes = [1, 16], strides = [1, 1]} : vector<4x16xf32> to vector<1x16xf32>
    %67 = vector.shape_cast %66 : vector<1x16xf32> to vector<16xf32>
    %68 = vector.shape_cast %67 : vector<16xf32> to vector<1x16xf32>
    %69 = vector.broadcast %65 : vector<32x1xf32> to vector<32x16xf32>
    %70 = vector.broadcast %68 : vector<1x16xf32> to vector<32x16xf32>
    %71 = arith.mulf %69, %70 : vector<32x16xf32>
    %72 = arith.addf %62, %71 : vector<32x16xf32>
    %73 = vector.extract_strided_slice %53 {offsets = [0, 2], sizes = [32, 1], strides = [1, 1]} : vector<32x4xf32> to vector<32x1xf32>
    %74 = vector.shape_cast %73 : vector<32x1xf32> to vector<32xf32>
    %75 = vector.shape_cast %74 : vector<32xf32> to vector<32x1xf32>
    %76 = vector.extract_strided_slice %52 {offsets = [2, 0], sizes = [1, 16], strides = [1, 1]} : vector<4x16xf32> to vector<1x16xf32>
    %77 = vector.shape_cast %76 : vector<1x16xf32> to vector<16xf32>
    %78 = vector.shape_cast %77 : vector<16xf32> to vector<1x16xf32>
    %79 = vector.broadcast %75 : vector<32x1xf32> to vector<32x16xf32>
    %80 = vector.broadcast %78 : vector<1x16xf32> to vector<32x16xf32>
    %81 = arith.mulf %79, %80 : vector<32x16xf32>
    %82 = arith.addf %72, %81 : vector<32x16xf32>
    %83 = vector.extract_strided_slice %53 {offsets = [0, 3], sizes = [32, 1], strides = [1, 1]} : vector<32x4xf32> to vector<32x1xf32>
    %84 = vector.shape_cast %83 : vector<32x1xf32> to vector<32xf32>
    %85 = vector.shape_cast %84 : vector<32xf32> to vector<32x1xf32>
    %86 = vector.extract_strided_slice %52 {offsets = [3, 0], sizes = [1, 16], strides = [1, 1]} : vector<4x16xf32> to vector<1x16xf32>
    %87 = vector.shape_cast %86 : vector<1x16xf32> to vector<16xf32>
    %88 = vector.shape_cast %87 : vector<16xf32> to vector<1x16xf32>
    %89 = vector.broadcast %85 : vector<32x1xf32> to vector<32x16xf32>
    %90 = vector.broadcast %88 : vector<1x16xf32> to vector<32x16xf32>
    %91 = arith.mulf %89, %90 : vector<32x16xf32>
    %92 = arith.addf %82, %91 : vector<32x16xf32>
    %cst_11 = arith.constant dense<0.000000e+00> : vector<32xf32>
    %93 = vector.multi_reduction <add>, %92, %cst_11 [1] : vector<32x16xf32> to vector<32xf32>
    %94 = vector.shape_cast %93 : vector<32xf32> to vector<32x1xf32>
    %95 = arith.addf %46, %94 : vector<32x1xf32>
    %96 = arith.mulf %92, %92 : vector<32x16xf32>
    %cst_12 = arith.constant dense<0.000000e+00> : vector<32xf32>
    %97 = vector.multi_reduction <add>, %96, %cst_12 [1] : vector<32x16xf32> to vector<32xf32>
    %98 = vector.shape_cast %97 : vector<32xf32> to vector<32x1xf32>
    %99 = arith.addf %50, %98 : vector<32x1xf32>
    %c0_13 = arith.constant 0 : index
    %c0_14 = arith.constant 0 : index
    %c0_15 = arith.constant 0 : index
    %100 = vector.load %arg4[%c0_13, %c0_14, %c0_15] : memref<1x32x1xf32, #tpu.memory_space<vmem>>, vector<1x32x1xf32>
    %101 = vector.shape_cast %100 : vector<1x32x1xf32> to vector<32x1xf32>
    %102 = vector.shape_cast %95 : vector<32x1xf32> to vector<1x32x1xf32>
    tpu.vector_store %arg4[%c0_13, %c0_14, %c0_15], %102 {strides = array<i32>} : memref<1x32x1xf32, #tpu.memory_space<vmem>>, vector<1x32x1xf32>,
    %c0_16 = arith.constant 0 : index
    %c0_17 = arith.constant 0 : index
    %c0_18 = arith.constant 0 : index
    %103 = vector.load %arg5[%c0_16, %c0_17, %c0_18] : memref<1x32x1xf32, #tpu.memory_space<vmem>>, vector<1x32x1xf32>
    %104 = vector.shape_cast %103 : vector<1x32x1xf32> to vector<32x1xf32>
    %105 = vector.shape_cast %99 : vector<32x1xf32> to vector<1x32x1xf32>
    tpu.vector_store %arg5[%c0_16, %c0_17, %c0_18], %105 {strides = array<i32>} : memref<1x32x1xf32, #tpu.memory_space<vmem>>, vector<1x32x1xf32>,
    return
  }
  func.func @transform_0(%arg0: i32, %arg1: i32) -> (i32, i32, i32) {
    %c0_i32 = arith.constant 0 : i32
    %c0_i32_0 = arith.constant 0 : i32
    return %arg0, %c0_i32, %arg1 : i32, i32, i32
  }
  func.func @transform_1(%arg0: i32, %arg1: i32) -> (i32, i32) {
    %c0_i32 = arith.constant 0 : i32
    %c0_i32_0 = arith.constant 0 : i32
    %c0_i32_1 = arith.constant 0 : i32
    return %c0_i32, %c0_i32_0 : i32, i32
  }
  func.func @transform_2(%arg0: i32, %arg1: i32) -> (i32, i32, i32) {
    %c1_i32 = arith.constant 1 : i32
    %0 = arith.muli %arg0, %c1_i32 : i32
    %1 = arith.addi %0, %arg1 : i32
    %c0_i32 = arith.constant 0 : i32
    %c0_i32_0 = arith.constant 0 : i32
    %c0_i32_1 = arith.constant 0 : i32
    return %1, %c0_i32, %c0_i32_0 : i32, i32, i32
  }
  func.func @transform_3(%arg0: i32, %arg1: i32) -> (i32, i32, i32) {
    %c1_i32 = arith.constant 1 : i32
    %0 = arith.muli %arg0, %c1_i32 : i32
    %1 = arith.addi %0, %arg1 : i32
    %c0_i32 = arith.constant 0 : i32
    %c0_i32_0 = arith.constant 0 : i32
    %c0_i32_1 = arith.constant 0 : i32
    return %1, %c0_i32, %c0_i32_0 : i32, i32, i32
  }
}

</mosaic_0001>

<llo_original>
// kernel: tpu_custom_call.1
$region0: #{tpu_custom_call.1}
  #allocation0 [shape = 'u32[]', space=smem, size = 0x4, offset = 0x4, fixed_abs, tag = 'smem constant byte address 0x4 - core index']
  #allocation1 [shape = 'u32[144,128]{1,0:T(1,128)}', space=vmem, size = 0x12000, scoped, tag = 'internal scratch']
  %s0 = inlined_call_operand.vmem [shape: f32[2,4,16], index: 0, kind: input, shape index: {}]
  %s1 = inlined_call_operand.vmem [shape: f32[32,4], index: 1, kind: input, shape index: {}]
  %s2 = inlined_call_operand.vmem [shape: f32[1,32,1], index: 2, kind: output, shape index: {0}]
  %s3 = inlined_call_operand.vmem [shape: f32[1,32,1], index: 3, kind: output, shape index: {1}]
  %4 = xla_tuple %s2, %s3
  %s5 = sld [smem:[#allocation0]]
  $region26: #{tpu_custom_call.1} parent=0
    _
  %s7 = ssub.s32 1, %s5
  %s8 = scalar_select 0, %s7, %s5
  // Predicated region
  $region2: #{tpu_custom_call.1} parent=0 // pred_check
    _
  $region3: #{tpu_custom_call.1} parent=0 // pred_check_branch
    %10 = sbr.rel (0) target = $region5
  $region4: #{tpu_custom_call.1} parent=0 // pred_region
    _
  $region5: #{tpu_custom_call.1} parent=0 // pred_fallthru
    _
  // Predicated region
  $region6: #{tpu_custom_call.1} parent=0 // pred_check
    _
  $region7: #{tpu_custom_call.1} parent=0 // pred_check_branch
    %12 = sbr.rel (0) target = $region9
  $region8: #{tpu_custom_call.1} parent=0 // pred_region
    _
  $region9: #{tpu_custom_call.1} parent=0 // pred_fallthru
    _
  %s13 = sadd.s32 0, 0
  %p14 = scmp.lt.s32.totalorder %s13, 0
  %s15 = scalar_select %p14, %s13, 0
  %s16 = smul.addr %s15, 4
  %s17 = smul.addr %s16, 8
  %s18 = scalar_lea.vmem %s2, %s17
  %s19 = sadd.s32 0, 0
  %p20 = scmp.lt.s32.totalorder %s19, 0
  %s21 = scalar_select %p20, %s19, 0
  %s22 = smul.addr %s21, 4
  %s23 = smul.addr %s22, 8
  %s24 = scalar_lea.vmem %s3, %s23
  %s25 = sadd.s32 0, 0
  %p26 = scmp.lt.s32.totalorder %s25, 0
  %s27 = scalar_select %p26, %s25, 0
  %s28 = smul.addr %s27, 4
  %s29 = smul.addr %s28, 8
  %s30 = scalar_lea.vmem %s2, %s29
  %s31 = sadd.s32 0, 0
  %s32 = sadd.s32 0, 0
  %p33 = scmp.lt.s32.totalorder %s32, 0
  %s34 = scalar_select %p33, %s32, 0
  %s35 = smul.addr %s34, 4
  %s36 = smul.addr %s35, 8
  %s37 = scalar_lea.vmem %s3, %s36
  %s38 = sadd.s32 0, 0
  %v39 = vld [vmem:[%s0] sm:$0xf]
  %v40 = vld [vmem:[%s1] sm:$0xff]
  %v41 = vld [vmem:[%s1 + $0x8] sm:$0xff]
  %v42 = vld [vmem:[%s1 + $0x10] sm:$0xff]
  %v43 = vld [vmem:[%s1 + $0x18] sm:$0xff]
  %45 = vset.pattern.permute.xlu0 0
  %46 = vperm.xlu0 %45, %v40
  %v47 = vpop.permute.xlu0 %46
  %50 = vset.pattern.permute.xlu0 0
  %51 = vperm.xlu0 %50, %v41
  %v52 = vpop.permute.xlu0 %51
  %55 = vset.pattern.permute.xlu0 0
  %56 = vperm.xlu0 %55, %v42
  %v57 = vpop.permute.xlu0 %56
  %60 = vset.pattern.permute.xlu0 0
  %61 = vperm.xlu0 %60, %v43
  %v62 = vpop.permute.xlu0 %61
  %v64 = vlaneseq
  %v65 = vshrl.u32 %v64, 7
  %v66 = vsub.s32 0, %v65
  %v67 = vrot.slane %v39, %v66
  %v68 = vmul.f32 %v47, %v67
  %v69 = vmul.f32 %v52, %v67
  %v70 = vmul.f32 %v57, %v67
  %v71 = vmul.f32 %v62, %v67
  %72 = vset.pattern.permute.xlu0 1
  %73 = vperm.xlu0 %72, %v40
  %v74 = vpop.permute.xlu0 %73
  %76 = vset.pattern.permute.xlu0 1
  %77 = vperm.xlu0 %76, %v41
  %v78 = vpop.permute.xlu0 %77
  %80 = vset.pattern.permute.xlu0 1
  %81 = vperm.xlu0 %80, %v42
  %v82 = vpop.permute.xlu0 %81
  %84 = vset.pattern.permute.xlu0 1
  %85 = vperm.xlu0 %84, %v43
  %v86 = vpop.permute.xlu0 %85
  %v88 = vlaneseq
  %v89 = vshrl.u32 %v88, 7
  %v90 = vsub.s32 1, %v89
  %v91 = vrot.slane %v39, %v90
  %v92 = vmul.f32 %v74, %v91
  %v93 = vmul.f32 %v78, %v91
  %v94 = vmul.f32 %v82, %v91
  %v95 = vmul.f32 %v86, %v91
  %v96 = vadd.f32 %v68, %v92
  %v97 = vadd.f32 %v69, %v93
  %v98 = vadd.f32 %v70, %v94
  %v99 = vadd.f32 %v71, %v95
  %100 = vset.pattern.permute.xlu0 2
  %101 = vperm.xlu0 %100, %v40
  %v102 = vpop.permute.xlu0 %101
  %104 = vset.pattern.permute.xlu0 2
  %105 = vperm.xlu0 %104, %v41
  %v106 = vpop.permute.xlu0 %105
  %108 = vset.pattern.permute.xlu0 2
  %109 = vperm.xlu0 %108, %v42
  %v110 = vpop.permute.xlu0 %109
  %112 = vset.pattern.permute.xlu0 2
  %113 = vperm.xlu0 %112, %v43
  %v114 = vpop.permute.xlu0 %113
  %v116 = vlaneseq
  %v117 = vshrl.u32 %v116, 7
  %v118 = vsub.s32 2, %v117
  %v119 = vrot.slane %v39, %v118
  %v120 = vmul.f32 %v102, %v119
  %v121 = vmul.f32 %v106, %v119
  %v122 = vmul.f32 %v110, %v119
  %v123 = vmul.f32 %v114, %v119
  %v124 = vadd.f32 %v96, %v120
  %v125 = vadd.f32 %v97, %v121
  %v126 = vadd.f32 %v98, %v122
  %v127 = vadd.f32 %v99, %v123
  %128 = vset.pattern.permute.xlu0 3
  %129 = vperm.xlu0 %128, %v40
  %v130 = vpop.permute.xlu0 %129
  %132 = vset.pattern.permute.xlu0 3
  %133 = vperm.xlu0 %132, %v41
  %v134 = vpop.permute.xlu0 %133
  %136 = vset.pattern.permute.xlu0 3
  %137 = vperm.xlu0 %136, %v42
  %v138 = vpop.permute.xlu0 %137
  %140 = vset.pattern.permute.xlu0 3
  %141 = vperm.xlu0 %140, %v43
  %v142 = vpop.permute.xlu0 %141
  %v144 = vlaneseq
  %v145 = vshrl.u32 %v144, 7
  %v146 = vsub.s32 3, %v145
  %v147 = vrot.slane %v39, %v146
  %v148 = vmul.f32 %v130, %v147
  %v149 = vmul.f32 %v134, %v147
  %v150 = vmul.f32 %v138, %v147
  %v151 = vmul.f32 %v142, %v147
  %v152 = vadd.f32 %v124, %v148
  %v153 = vadd.f32 %v125, %v149
  %v154 = vadd.f32 %v126, %v150
  %v155 = vadd.f32 %v127, %v151
  %vm156 = vcmask 130048
  %v157 = vsel %vm156, %v152, 0.0
  %158 = vadd.xlane.f32.xlu0 %v157
  %v159 = vpop.xlane.xlu0 %158
  %v160 = vsel %vm156, %v153, 0.0
  %161 = vadd.xlane.f32.xlu0 %v160
  %v162 = vpop.xlane.xlu0 %161
  %v163 = vsel %vm156, %v154, 0.0
  %164 = vadd.xlane.f32.xlu0 %v163
  %v165 = vpop.xlane.xlu0 %164
  %v166 = vsel %vm156, %v155, 0.0
  %167 = vadd.xlane.f32.xlu0 %v166
  %v168 = vpop.xlane.xlu0 %167
  %v169 = vadd.f32 %v159, 0.0
  %v170 = vadd.f32 %v162, 0.0
  %v171 = vadd.f32 %v165, 0.0
  %v172 = vadd.f32 %v168, 0.0
  %v173 = vmul.f32 %v152, %v152
  %v174 = vmul.f32 %v153, %v153
  %v175 = vmul.f32 %v154, %v154
  %v176 = vmul.f32 %v155, %v155
  %v177 = vsel %vm156, %v173, 0.0
  %178 = vadd.xlane.f32.xlu0 %v177
  %v179 = vpop.xlane.xlu0 %178
  %v180 = vsel %vm156, %v174, 0.0
  %181 = vadd.xlane.f32.xlu0 %v180
  %v182 = vpop.xlane.xlu0 %181
  %v183 = vsel %vm156, %v175, 0.0
  %184 = vadd.xlane.f32.xlu0 %v183
  %v185 = vpop.xlane.xlu0 %184
  %v186 = vsel %vm156, %v176, 0.0
  %187 = vadd.xlane.f32.xlu0 %v186
  %v188 = vpop.xlane.xlu0 %187
  %v189 = vadd.f32 %v179, 0.0
  %v190 = vadd.f32 %v182, 0.0
  %v191 = vadd.f32 %v185, 0.0
  %v192 = vadd.f32 %v188, 0.0
  %s193 = scalar_lea.vmem %s0, 4
  %v194 = vld [vmem:[%s193] sm:$0xf]
  %v195 = vlaneseq
  %v196 = vshrl.u32 %v195, 7
  %v197 = vsub.s32 0, %v196
  %v198 = vrot.slane %v194, %v197
  %v199 = vmul.f32 %v47, %v198
  %v200 = vmul.f32 %v52, %v198
  %v201 = vmul.f32 %v57, %v198
  %v202 = vmul.f32 %v62, %v198
  %v203 = vlaneseq
  %v204 = vshrl.u32 %v203, 7
  %v205 = vsub.s32 1, %v204
  %v206 = vrot.slane %v194, %v205
  %v207 = vmul.f32 %v74, %v206
  %v208 = vmul.f32 %v78, %v206
  %v209 = vmul.f32 %v82, %v206
  %v210 = vmul.f32 %v86, %v206
  %v211 = vadd.f32 %v199, %v207
  %v212 = vadd.f32 %v200, %v208
  %v213 = vadd.f32 %v201, %v209
  %v214 = vadd.f32 %v202, %v210
  %v215 = vlaneseq
  %v216 = vshrl.u32 %v215, 7
  %v217 = vsub.s32 2, %v216
  %v218 = vrot.slane %v194, %v217
  %v219 = vmul.f32 %v102, %v218
  %v220 = vmul.f32 %v106, %v218
  %v221 = vmul.f32 %v110, %v218
  %v222 = vmul.f32 %v114, %v218
  %v223 = vadd.f32 %v211, %v219
  %v224 = vadd.f32 %v212, %v220
  %v225 = vadd.f32 %v213, %v221
  %v226 = vadd.f32 %v214, %v222
  %v227 = vlaneseq
  %v228 = vshrl.u32 %v227, 7
  %v229 = vsub.s32 3, %v228
  %v230 = vrot.slane %v194, %v229
  %v231 = vmul.f32 %v130, %v230
  %v232 = vmul.f32 %v134, %v230
  %v233 = vmul.f32 %v138, %v230
  %v234 = vmul.f32 %v142, %v230
  %v235 = vadd.f32 %v223, %v231
  %v236 = vadd.f32 %v224, %v232
  %v237 = vadd.f32 %v225, %v233
  %v238 = vadd.f32 %v226, %v234
  %v239 = vsel %vm156, %v235, 0.0
  %240 = vadd.xlane.f32.xlu0 %v239
  %v241 = vpop.xlane.xlu0 %240
  %v242 = vsel %vm156, %v236, 0.0
  %243 = vadd.xlane.f32.xlu0 %v242
  %v244 = vpop.xlane.xlu0 %243
  %v245 = vsel %vm156, %v237, 0.0
  %246 = vadd.xlane.f32.xlu0 %v245
  %v247 = vpop.xlane.xlu0 %246
  %v248 = vsel %vm156, %v238, 0.0
  %249 = vadd.xlane.f32.xlu0 %v248
  %v250 = vpop.xlane.xlu0 %249
  %v251 = vadd.f32 %v169, %v241
  %v252 = vadd.f32 %v170, %v244
  %v253 = vadd.f32 %v171, %v247
  %v254 = vadd.f32 %v172, %v250
  %v255 = vmul.f32 %v235, %v235
  %v256 = vmul.f32 %v236, %v236
  %v257 = vmul.f32 %v237, %v237
  %v258 = vmul.f32 %v238, %v238
  %v259 = vsel %vm156, %v255, 0.0
  %260 = vadd.xlane.f32.xlu0 %v259
  %v261 = vpop.xlane.xlu0 %260
  %v262 = vsel %vm156, %v256, 0.0
  %263 = vadd.xlane.f32.xlu0 %v262
  %v264 = vpop.xlane.xlu0 %263
  %v265 = vsel %vm156, %v257, 0.0
  %266 = vadd.xlane.f32.xlu0 %v265
  %v267 = vpop.xlane.xlu0 %266
  %v268 = vsel %vm156, %v258, 0.0
  %269 = vadd.xlane.f32.xlu0 %v268
  %v270 = vpop.xlane.xlu0 %269
  %v271 = vadd.f32 %v189, %v261
  %v272 = vadd.f32 %v190, %v264
  %v273 = vadd.f32 %v191, %v267
  %v274 = vadd.f32 %v192, %v270
  %vm275 = vcmask 7168
  %276 = vst.msk [vmem:[%s30] sm:$0xff] %vm275, %v251
  %277 = vst.msk [vmem:[%s30 + $0x8] sm:$0xff] %vm275, %v252
  %278 = vst.msk [vmem:[%s30 + $0x10] sm:$0xff] %vm275, %v253
  %279 = vst.msk [vmem:[%s30 + $0x18] sm:$0xff] %vm275, %v254
  %280 = vst.msk [vmem:[%s37] sm:$0xff] %vm275, %v271
  %281 = vst.msk [vmem:[%s37 + $0x8] sm:$0xff] %vm275, %v272
  %282 = vst.msk [vmem:[%s37 + $0x10] sm:$0xff] %vm275, %v273
  %283 = vst.msk [vmem:[%s37 + $0x18] sm:$0xff] %vm275, %v274
  %s284 = sadd.s32 0, 0
  %p285 = scmp.lt.s32.totalorder %s284, 0
  %s286 = scalar_select %p285, %s284, 0
  %s287 = smul.addr %s286, 4
  %s288 = smul.addr %s287, 8
  %s289 = scalar_lea.vmem %s2, %s288
  %s290 = sadd.s32 0, 0
  %p291 = scmp.lt.s32.totalorder %s290, 0
  %s292 = scalar_select %p291, %s290, 0
  %s293 = smul.addr %s292, 4
  %s294 = smul.addr %s293, 8
  %s295 = scalar_lea.vmem %s3, %s294
  // Predicated region
  $region10: #{tpu_custom_call.1} parent=0 // pred_check
    _
  $region11: #{tpu_custom_call.1} parent=0 // pred_check_branch
    %297 = sbr.rel (0) target = $region13
  $region12: #{tpu_custom_call.1} parent=0 // pred_region
    %s298 = sadd.s32 0, 0
  $region13: #{tpu_custom_call.1} parent=0 // pred_fallthru
    _
  // Predicated region
  $region14: #{tpu_custom_call.1} parent=0 // pred_check
    _
  $region15: #{tpu_custom_call.1} parent=0 // pred_check_branch
    %300 = sbr.rel (0) target = $region17
  $region16: #{tpu_custom_call.1} parent=0 // pred_region
    %s301 = sadd.s32 0, 0
  $region17: #{tpu_custom_call.1} parent=0 // pred_fallthru
    _
  // Predicated region
  $region18: #{tpu_custom_call.1} parent=0 // pred_check
    _
  $region19: #{tpu_custom_call.1} parent=0 // pred_check_branch
    %303 = sbr.rel (0) target = $region21
  $region20: #{tpu_custom_call.1} parent=0 // pred_region
    %s304 = sadd.s32 0, 0
    %p305 = scmp.lt.s32.totalorder %s304, 0
    %s306 = scalar_select %p305, %s304, 0
    %s307 = smul.addr %s306, 4
    %s308 = smul.addr %s307, 8
    %s309 = scalar_lea.vmem %s2, %s308
  $region21: #{tpu_custom_call.1} parent=0 // pred_fallthru
    _
  // Predicated region
  $region22: #{tpu_custom_call.1} parent=0 // pred_check
    _
  $region23: #{tpu_custom_call.1} parent=0 // pred_check_branch
    %311 = sbr.rel (0) target = $region25
  $region24: #{tpu_custom_call.1} parent=0 // pred_region
    %s312 = sadd.s32 0, 0
    %p313 = scmp.lt.s32.totalorder %s312, 0
    %s314 = scalar_select %p313, %s312, 0
    %s315 = smul.addr %s314, 4
    %s316 = smul.addr %s315, 8
    %s317 = scalar_lea.vmem %s3, %s316
  $region25: #{tpu_custom_call.1} parent=0 // pred_fallthru
    _

</llo_original>
